<compile_context>
chip_gen: v5e
topology: v5e:2x2
jax: 0.10.0
libtpu: 0.0.40
codegen_flags: <defaults>
</compile_context>

<pallas_src>
import jax
import jax.numpy as jnp
from jax.experimental import pallas as pl
from jax.experimental.pallas import tpu as pltpu


def _multicond_kernel(w_ref, b_ref, cond_ref, mask_ref, out_ref):
    # w_ref    : [O, C]   pre-summed weights (VMEM-resident across the grid)
    # b_ref    : [O, 1]   pre-summed bias (f32)
    # cond_ref : [C, TN]  one batch element, one lane-dense time tile
    # mask_ref : [1, TN]  mask tile for the same batch element
    # out_ref  : [O, TN]
    acc = jnp.dot(w_ref[...], cond_ref[...], preferred_element_type=jnp.float32)
    # Fused epilogue: single bias broadcast-add + mask multiply, then store.
    out_ref[...] = (
        (acc + b_ref[...]) * mask_ref[...].astype(jnp.float32)
    ).astype(out_ref.dtype)


def _round_up(x, m):
    return (x + m - 1) // m * m


def multi_cond_layer(cond, x_mask, weights, biases, *, tn=512, compute_dtype=None,
                     vmem_limit_bytes=None):
    """Pallas implementation of MultiCondLayer.forward.

    Args:
      cond:    [B, C, N] float
      x_mask:  [B, 1, N] float
      weights: [n_cond, O, C] float  (stacked nn.Linear weights)
      biases:  [n_cond, O]    float  (stacked nn.Linear biases)
      tn:      target time-tile size (rounded to a multiple of 128).  Size it
               against the per-chip VMEM budget (roughly half the v6e tile on
               v7x's 64 MiB VMEM).
      compute_dtype: optional dtype for the MXU inputs (e.g. jnp.bfloat16 on
               v6e/v7x); accumulation stays f32.
      vmem_limit_bytes: optional override of the scoped-VMEM limit.

    Returns:
      [B, O, N] in cond's original dtype.
    """
    B, C, N = cond.shape
    n_cond, O, C_w = weights.shape
    assert C_w == C
    assert O == C, "reference module's residual sum requires gin_channels == out_channels"
    assert x_mask.shape == (B, 1, N)

    out_dtype = cond.dtype

    # Fold the condition sum algebraically (parameters, constant per call).
    w_sum = weights.sum(axis=0)                                   # [O, C]
    b_sum = biases.sum(axis=0).astype(jnp.float32).reshape(O, 1)  # [O, 1]

    if compute_dtype is not None:
        w_sum = w_sum.astype(compute_dtype)
        cond = cond.astype(compute_dtype)

    # Lane-dense time tiling: TN a multiple of 128; pad N so TN divides it.
    tn = max(128, _round_up(min(tn, _round_up(N, 128)), 128))
    n_pad = _round_up(N, tn)
    if n_pad != N:
        cond = jnp.pad(cond, ((0, 0), (0, 0), (0, n_pad - N)))
        x_mask = jnp.pad(x_mask, ((0, 0), (0, 0), (0, n_pad - N)))

    grid = (B, n_pad // tn)

    out = pl.pallas_call(
        _multicond_kernel,
        out_shape=jax.ShapeDtypeStruct((B, O, n_pad), out_dtype),
        grid_spec=pltpu.PrefetchScalarGridSpec(
            num_scalar_prefetch=0,
            grid=grid,
            in_specs=[
                pl.BlockSpec((O, C), lambda b, t: (0, 0)),             # summed weights
                pl.BlockSpec((O, 1), lambda b, t: (0, 0)),             # summed bias
                pl.BlockSpec((None, C, tn), lambda b, t: (b, 0, t)),   # cond tile
                pl.BlockSpec((None, 1, tn), lambda b, t: (b, 0, t)),   # mask tile
            ],
            out_specs=pl.BlockSpec((None, O, tn), lambda b, t: (b, 0, t)),
        ),
        compiler_params=pltpu.CompilerParams(
            dimension_semantics=("parallel", "parallel"),
            vmem_limit_bytes=vmem_limit_bytes,
        ),
    )(w_sum, b_sum, cond, x_mask)

    if n_pad != N:
        out = out[:, :, :N]
    return out


def _reference(cond, x_mask, weights, biases):
    # Pure-JAX reference mirroring the PyTorch forward (per-condition loop).
    n_cond = weights.shape[0]
    cond_out = jnp.zeros_like(cond)
    for i in range(n_cond):
        cond_in = jnp.einsum("oc,bcn->bon", weights[i], cond) + biases[i][None, :, None]
        cond_out = cond_out + cond_in
    return cond_out * x_mask


if __name__ == "__main__":
    key = jax.random.PRNGKey(0)

    # Small shapes consistent with the module: gin_channels == out_channels.
    B = 2
    gin_channels = 32
    out_channels = 32
    n_cond = 3
    N = 16  # sequence length (T == N)

    k_cond, k_mask, k_w, k_b = jax.random.split(key, 4)
    cond = jax.random.normal(k_cond, (B, gin_channels, N), dtype=jnp.float32)
    # binary-ish mask like VITS x_mask
    x_mask = (jax.random.uniform(k_mask, (B, 1, N)) > 0.3).astype(jnp.float32)

    # Deterministic "nn.Linear"-style parameters (synthetic init, no checkpoint).
    bound = 1.0 / (gin_channels ** 0.5)
    weights = jax.random.uniform(
        k_w, (n_cond, out_channels, gin_channels), minval=-bound, maxval=bound,
        dtype=jnp.float32)
    biases = jax.random.uniform(
        k_b, (n_cond, out_channels), minval=-bound, maxval=bound, dtype=jnp.float32)

    out = multi_cond_layer(cond, x_mask, weights, biases)
    out = jax.block_until_ready(out)

    ref = _reference(cond, x_mask, weights, biases)
    assert out.shape == (B, out_channels, N)
    assert jnp.allclose(out, ref, atol=1e-5, rtol=1e-5), "mismatch vs reference"

    print("KERNEL_OK")
</pallas_src>

<mosaic_0001>
module attributes {stable_mosaic.version = 11 : i64} {
  func.func @_multicond_kernel(%arg0: i32, %arg1: i32, %arg2: memref<32x32xf32, #tpu.memory_space<vmem>>, %arg3: memref<32x1xf32, #tpu.memory_space<vmem>>, %arg4: memref<1x32x128xf32, #tpu.memory_space<vmem>>, %arg5: memref<1x1x128xf32, #tpu.memory_space<vmem>>, %arg6: memref<1x32x128xf32, #tpu.memory_space<vmem>>) attributes {dimension_semantics = [#tpu.dimension_semantics<parallel>, #tpu.dimension_semantics<parallel>], iteration_bounds = array<i64: 2, 1>, scalar_prefetch = 0 : i64, scratch_operands = 0 : i64, tpu.core_type = #tpu.core_type<tc>, window_params = [{pipeline_mode = #tpu.pipeline_mode<synchronous>, transform_indices = @transform_0, window_bounds = array<i64: 32, 32>}, {pipeline_mode = #tpu.pipeline_mode<synchronous>, transform_indices = @transform_1, window_bounds = array<i64: 32, 1>}, {transform_indices = @transform_2, window_bounds = array<i64: 1, 32, 128>}, {transform_indices = @transform_3, window_bounds = array<i64: 1, 1, 128>}, {transform_indices = @transform_4, window_bounds = array<i64: 1, 32, 128>}]} {
    %c0 = arith.constant 0 : index
    %c0_0 = arith.constant 0 : index
    %0 = vector.load %arg2[%c0, %c0_0] : memref<32x32xf32, #tpu.memory_space<vmem>>, vector<32x32xf32>
    %c0_1 = arith.constant 0 : index
    %c0_2 = arith.constant 0 : index
    %c0_3 = arith.constant 0 : index
    %1 = vector.load %arg4[%c0_1, %c0_2, %c0_3] : memref<1x32x128xf32, #tpu.memory_space<vmem>>, vector<1x32x128xf32>
    %2 = vector.shape_cast %1 : vector<1x32x128xf32> to vector<32x128xf32>
    %cst = arith.constant dense<0.000000e+00> : vector<32x128xf32>
    %3 = tpu.matmul %0, %2, %cst {dimension_numbers = #tpu.dot_dimension_numbers<[1], [0], [0], [1], [0, 0, 1, 1], [], []>} : vector<32x32xf32>, vector<32x128xf32>, vector<32x128xf32> -> vector<32x128xf32>
    %c0_4 = arith.constant 0 : index
    %c0_5 = arith.constant 0 : index
    %4 = vector.load %arg3[%c0_4, %c0_5] : memref<32x1xf32, #tpu.memory_space<vmem>>, vector<32x1xf32>
    %5 = vector.broadcast %4 : vector<32x1xf32> to vector<32x128xf32>
    %6 = arith.addf %3, %5 : vector<32x128xf32>
    %c0_6 = arith.constant 0 : index
    %c0_7 = arith.constant 0 : index
    %c0_8 = arith.constant 0 : index
    %7 = vector.load %arg5[%c0_6, %c0_7, %c0_8] : memref<1x1x128xf32, #tpu.memory_space<vmem>>, vector<1x1x128xf32>
    %8 = vector.shape_cast %7 : vector<1x1x128xf32> to vector<1x128xf32>
    %9 = vector.broadcast %8 : vector<1x128xf32> to vector<32x128xf32>
    %10 = arith.mulf %6, %9 : vector<32x128xf32>
    %c0_9 = arith.constant 0 : index
    %c0_10 = arith.constant 0 : index
    %c0_11 = arith.constant 0 : index
    %11 = vector.load %arg6[%c0_9, %c0_10, %c0_11] : memref<1x32x128xf32, #tpu.memory_space<vmem>>, vector<1x32x128xf32>
    %12 = vector.shape_cast %11 : vector<1x32x128xf32> to vector<32x128xf32>
    %13 = vector.shape_cast %10 : vector<32x128xf32> to vector<1x32x128xf32>
    tpu.vector_store %arg6[%c0_9, %c0_10, %c0_11], %13 {strides = array<i32>} : memref<1x32x128xf32, #tpu.memory_space<vmem>>, vector<1x32x128xf32>,
    return
  }
  func.func @transform_0(%arg0: i32, %arg1: i32) -> (i32, i32) {
    %c0_i32 = arith.constant 0 : i32
    %c0_i32_0 = arith.constant 0 : i32
    %c0_i32_1 = arith.constant 0 : i32
    return %c0_i32, %c0_i32_0 : i32, i32
  }
  func.func @transform_1(%arg0: i32, %arg1: i32) -> (i32, i32) {
    %c0_i32 = arith.constant 0 : i32
    %c0_i32_0 = arith.constant 0 : i32
    %c0_i32_1 = arith.constant 0 : i32
    return %c0_i32, %c0_i32_0 : i32, i32
  }
  func.func @transform_2(%arg0: i32, %arg1: i32) -> (i32, i32, i32) {
    %c0_i32 = arith.constant 0 : i32
    %c0_i32_0 = arith.constant 0 : i32
    return %arg0, %c0_i32, %arg1 : i32, i32, i32
  }
  func.func @transform_3(%arg0: i32, %arg1: i32) -> (i32, i32, i32) {
    %c0_i32 = arith.constant 0 : i32
    %c0_i32_0 = arith.constant 0 : i32
    return %arg0, %c0_i32, %arg1 : i32, i32, i32
  }
  func.func @transform_4(%arg0: i32, %arg1: i32) -> (i32, i32, i32) {
    %c0_i32 = arith.constant 0 : i32
    %c0_i32_0 = arith.constant 0 : i32
    return %arg0, %c0_i32, %arg1 : i32, i32, i32
  }
}

</mosaic_0001>

<llo_original>
// kernel: tpu_custom_call.1
$region0: #{tpu_custom_call.1}
  #allocation0 [shape = 'u32[]', space=smem, size = 0x4, offset = 0x4, fixed_abs, tag = 'smem constant byte address 0x4 - core index']
  #allocation1 [shape = 'u32[72,128]{1,0:T(1,128)}', space=vmem, size = 0x9000, scoped, tag = 'internal scratch']
  %s0 = inlined_call_operand.vmem [shape: f32[32,32], index: 0, kind: input, shape index: {}]
  %s1 = inlined_call_operand.vmem [shape: f32[32,1], index: 1, kind: input, shape index: {}]
  %s2 = inlined_call_operand.hbm [shape: f32[2,32,128], index: 2, kind: input, shape index: {}]
  %s3 = inlined_call_operand.vmem [shape: f32[2,1,128], index: 3, kind: input, shape index: {}]
  %s4 = inlined_call_operand.hbm [shape: f32[2,32,128], index: 4, kind: output, shape index: {}]
  %s5 = sld [smem:[#allocation0]]
  $region53: #{tpu_custom_call.1} parent=0
    _
  %s7 = ssub.s32 1, %s5
  %s8 = scalar_select 0, %s7, %s5
  $region1: #{tpu_custom_call.1} parent=0
    #allocation2 [shape = 'u8[32768]{0}', space=vmem, size = 0x8000, scoped, tag = 'input window, operand 2']
    #allocation3 [shape = 's32[2]{0}', space=sflag, size = 0x8, scoped, tag = 'scoped memory for tpu_custom_call.1']
    #allocation4 [shape = 's32[2]{0}', space=sflag, size = 0x8, scoped, tag = 'scoped memory for tpu_custom_call.1']
    #allocation5 [shape = 'u8[32768]{0}', space=vmem, size = 0x8000, scoped, tag = 'output window, operand 0']
    %9 = vsyncpa [#allocation3], 0
    %s10 = scalar_lea.sflag [#allocation3], 1
    %11 = vsyncpa %s10, 0
    %12 = vsyncpa [#allocation4], 0
    %s13 = scalar_lea.sflag [#allocation4], 1
    %14 = vsyncpa %s13, 0
    loop: start=0, step=1, limit=4
    $region2: #{tpu_custom_call.1} parent=1 // loop_pre_header
      _
    $region3: #{tpu_custom_call.1} parent=1 // loop_header
      %s16 = sphi 0, %s20
      %p17 = scmp.ge.s32.totalorder %s16, 4
      %s23 = sphi 0, %s35
      %s24 = sphi 0, %s31
      %s25 = sphi 0, %s23
      %s26 = sphi 0, %s24
      %s27 = sphi 0, %s25
      %s28 = sphi 0, %s26
      %s36 = sphi 0, %s36
      %s38 = sphi 0, %s36
      %s39 = sphi 0, %s38
      %s53 = sphi 0, %s39
      %s57 = sphi 0, %s57
      %s59 = sphi 0, %s57
      %s60 = sphi 0, %s59
      %s74 = sphi 0, %s60
      %s82 = sphi 0, %s84
      %s85 = sphi 0, %s82
      %s86 = sphi 0, %s85
      %s102 = sphi 0, %s86
      %s110 = sphi 0, %s112
      %s113 = sphi 0, %s110
      %s114 = sphi 0, %s113
      %s130 = sphi 0, %s114
      %s138 = sphi 0, %s140
      %s141 = sphi 0, %s138
      %s142 = sphi 0, %s141
      %s158 = sphi 0, %s142
    $region4: #{tpu_custom_call.1} parent=1 // loop_header_branch
      %19 = sbr.rel (%p17) target = $region8
    $region5: #{tpu_custom_call.1} parent=1 // loop_body
      %s21 = ssub.s32 %s16, 1
      %s22 = ssub.s32 %s16, 2
      %s29 = sadd.s32 1, %s24
      %p30 = scmp.ge.s32.totalorder %s29, 1
      %s31 = scalar_select %p30, 0, %s29
      %s32 = sadd.s32 1, %s23
      %s33 = scalar_select %p30, %s32, %s23
      %p34 = scmp.ge.s32.totalorder %s33, 2
      %s35 = scalar_select %p34, 0, %s33
      %s37 = sadd.s32 %s36, 1
      %p40 = scmp.eq.s32.totalorder %s16, 1
      %p41 = scmp.ne.s32.totalorder %s36, %s38
      %p42 = scmp.eq.s32.totalorder %s16, 0
      %p43 = por %p41, %p42
      %p44 = scmp.ne.s32.totalorder %s36, %s38
      %p45 = scmp.eq.s32.totalorder %s21, 1
      %p46 = por %p44, %p45
      %p47 = scmp.ne.s32.totalorder %s38, %s39
      %p48 = scmp.eq.s32.totalorder %s21, 0
      %p49 = por %p47, %p48
      %p50 = scmp.ne.s32.totalorder %s38, %s39
      %p51 = scmp.eq.s32.totalorder %s22, 1
      %p52 = por %p50, %p51
      %p54 = scmp.ne.s32.totalorder %s39, %s53
      %p55 = scmp.eq.s32.totalorder %s22, 0
      %p56 = por %p54, %p55
      %s58 = sadd.s32 %s57, 1
      %p61 = scmp.eq.s32.totalorder %s16, 1
      %p62 = scmp.ne.s32.totalorder %s57, %s59
      %p63 = scmp.eq.s32.totalorder %s16, 0
      %p64 = por %p62, %p63
      %p65 = scmp.ne.s32.totalorder %s57, %s59
      %p66 = scmp.eq.s32.totalorder %s21, 1
      %p67 = por %p65, %p66
      %p68 = scmp.ne.s32.totalorder %s59, %s60
      %p69 = scmp.eq.s32.totalorder %s21, 0
      %p70 = por %p68, %p69
      %p71 = scmp.ne.s32.totalorder %s59, %s60
      %p72 = scmp.eq.s32.totalorder %s22, 1
      %p73 = por %p71, %p72
      %p75 = scmp.ne.s32.totalorder %s60, %s74
      %p76 = scmp.eq.s32.totalorder %s22, 0
      %p77 = por %p75, %p76
      %s78 = ssub.s32 %s23, %s35
      %s79 = ssub.s32 %s24, %s31
      %s80 = sor.u32 %s78, %s79
      %p81 = scmp.eq.s32.totalorder %s80, 0
      %s83 = sadd.s32 %s82, 1
      %s84 = scalar_select %p81, %s82, %s83
      %p87 = pneg %p81
      %p88 = scmp.eq.s32.totalorder %s16, 1
      %p89 = por %p87, %p88
      %p90 = scmp.ne.s32.totalorder %s82, %s85
      %p91 = scmp.eq.s32.totalorder %s16, 0
      %p92 = por %p90, %p91
      %p93 = scmp.ne.s32.totalorder %s82, %s85
      %p94 = scmp.eq.s32.totalorder %s21, 1
      %p95 = por %p93, %p94
      %p96 = scmp.ne.s32.totalorder %s85, %s86
      %p97 = scmp.eq.s32.totalorder %s21, 0
      %p98 = por %p96, %p97
      %p99 = scmp.ne.s32.totalorder %s85, %s86
      %p100 = scmp.eq.s32.totalorder %s22, 1
      %p101 = por %p99, %p100
      %p103 = scmp.ne.s32.totalorder %s86, %s102
      %p104 = scmp.eq.s32.totalorder %s22, 0
      %p105 = por %p103, %p104
      %s106 = ssub.s32 %s23, %s35
      %s107 = ssub.s32 %s24, %s31
      %s108 = sor.u32 %s106, %s107
      %p109 = scmp.eq.s32.totalorder %s108, 0
      %s111 = sadd.s32 %s110, 1
      %s112 = scalar_select %p109, %s110, %s111
      %p115 = pneg %p109
      %p116 = scmp.eq.s32.totalorder %s16, 1
      %p117 = por %p115, %p116
      %p118 = scmp.ne.s32.totalorder %s110, %s113
      %p119 = scmp.eq.s32.totalorder %s16, 0
      %p120 = por %p118, %p119
      %p121 = scmp.ne.s32.totalorder %s110, %s113
      %p122 = scmp.eq.s32.totalorder %s21, 1
      %p123 = por %p121, %p122
      %p124 = scmp.ne.s32.totalorder %s113, %s114
      %p125 = scmp.eq.s32.totalorder %s21, 0
      %p126 = por %p124, %p125
      %p127 = scmp.ne.s32.totalorder %s113, %s114
      %p128 = scmp.eq.s32.totalorder %s22, 1
      %p129 = por %p127, %p128
      %p131 = scmp.ne.s32.totalorder %s114, %s130
      %p132 = scmp.eq.s32.totalorder %s22, 0
      %p133 = por %p131, %p132
      %s134 = ssub.s32 %s23, %s35
      %s135 = ssub.s32 %s24, %s31
      %s136 = sor.u32 %s134, %s135
      %p137 = scmp.eq.s32.totalorder %s136, 0
      %s139 = sadd.s32 %s138, 1
      %s140 = scalar_select %p137, %s138, %s139
      %p143 = pneg %p137
      %p144 = scmp.eq.s32.totalorder %s16, 1
      %p145 = por %p143, %p144
      %p146 = scmp.ne.s32.totalorder %s138, %s141
      %p147 = scmp.eq.s32.totalorder %s16, 0
      %p148 = por %p146, %p147
      %p149 = scmp.ne.s32.totalorder %s138, %s141
      %p150 = scmp.eq.s32.totalorder %s21, 1
      %p151 = por %p149, %p150
      %p152 = scmp.ne.s32.totalorder %s141, %s142
      %p153 = scmp.eq.s32.totalorder %s21, 0
      %p154 = por %p152, %p153
      %p155 = scmp.ne.s32.totalorder %s141, %s142
      %p156 = scmp.eq.s32.totalorder %s22, 1
      %p157 = por %p155, %p156
      %p159 = scmp.ne.s32.totalorder %s142, %s158
      %p160 = scmp.eq.s32.totalorder %s22, 0
      %p161 = por %p159, %p160
      %p162 = scmp.le.s32.totalorder 1, %s16
      %p163 = scmp.lt.s32.totalorder %s16, 3
      %p164 = pnand %p162, %p163
      %p165 = pneg %p164
      // Predicated region
      $region9: #{tpu_custom_call.1} parent=5 // pred_check
        _
      $region10: #{tpu_custom_call.1} parent=5 // pred_check_branch
        %167 = sbr.rel (%p164) target = $region12
      $region11: #{tpu_custom_call.1} parent=5 // pred_region
        %s168 = ssub.s32 %s16, 1
        // Predicated region
        $region13: #{tpu_custom_call.1} parent=11 // pred_check
          %p169 = pneg %p49
        $region14: #{tpu_custom_call.1} parent=11 // pred_check_branch
          %171 = sbr.rel (%p169) target = $region16
        $region15: #{tpu_custom_call.1} parent=11 // pred_region
          _
        $region16: #{tpu_custom_call.1} parent=11 // pred_fallthru
          _
        // Predicated region
        $region17: #{tpu_custom_call.1} parent=11 // pred_check
          %p172 = pneg %p70
        $region18: #{tpu_custom_call.1} parent=11 // pred_check_branch
          %174 = sbr.rel (%p172) target = $region20
        $region19: #{tpu_custom_call.1} parent=11 // pred_region
          _
        $region20: #{tpu_custom_call.1} parent=11 // pred_fallthru
          _
      $region12: #{tpu_custom_call.1} parent=5 // pred_fallthru
        _
      %p175 = scmp.lt.s32.totalorder %s16, 2
      // Predicated region
      $region21: #{tpu_custom_call.1} parent=5 // pred_check
        %p176 = pneg %p175
      $region22: #{tpu_custom_call.1} parent=5 // pred_check_branch
        %178 = sbr.rel (%p176) target = $region24
      $region23: #{tpu_custom_call.1} parent=5 // pred_region
        // Predicated region
        $region25: #{tpu_custom_call.1} parent=23 // pred_check
          %p179 = pneg %p92
        $region26: #{tpu_custom_call.1} parent=23 // pred_check_branch
          %181 = sbr.rel (%p179) target = $region28
        $region27: #{tpu_custom_call.1} parent=23 // pred_region
          %s182 = sand.u32 %s82, 1
          %s183 = scalar_lea.sflag [#allocation3], %s182
          %s184 = sand.u32 %s82, 1
          %s185 = smul.addr %s184, 32
          %s186 = scalar_lea.vmem [#allocation2], %s185
          %188 = vsyncadd %s183, 0
          %s189 = smul.addr %s23, 4
          %s190 = sadd.s32 %s24, %s189
          %s191 = smul.addr %s190, 8
          %s192 = scalar_lea.hbm %s2, %s191
          %s193 = sshll.u32 %s192, 4
          %s194 = int_to_ptr.hbm [resolvable:$true] %s193
          %s195 = sshll.u32 %s186, 4
          %s196 = int_to_ptr.vmem [resolvable:$true] %s195
          %201 = dma.hbm_to_vmem [thread:$0]  %s194, 512, %s196, %s183, 128, 128, 8
        $region28: #{tpu_custom_call.1} parent=23 // pred_fallthru
          _
        // Predicated region
        $region29: #{tpu_custom_call.1} parent=23 // pred_check
          %p202 = pneg %p120
        $region30: #{tpu_custom_call.1} parent=23 // pred_check_branch
          %204 = sbr.rel (%p202) target = $region32
        $region31: #{tpu_custom_call.1} parent=23 // pred_region
          %p205 = scmp.lt.s32.totalorder %s23, 1
          %s206 = scalar_select %p205, %s23, 1
          %p207 = scmp.lt.s32.totalorder %s24, 0
          %s208 = scalar_select %p207, %s24, 0
          %s209 = sadd.s32 %s208, %s206
          %s210 = scalar_lea.vmem %s3, %s209
        $region32: #{tpu_custom_call.1} parent=23 // pred_fallthru
          _
      $region24: #{tpu_custom_call.1} parent=5 // pred_fallthru
        _
      %p211 = scmp.le.s32.totalorder 1, %s16
      %p212 = scmp.lt.s32.totalorder %s16, 3
      %p213 = pnand %p211, %p212
      %p214 = pneg %p213
      // Predicated region
      $region33: #{tpu_custom_call.1} parent=5 // pred_check
        _
      $region34: #{tpu_custom_call.1} parent=5 // pred_check_branch
        %216 = sbr.rel (%p213) target = $region36
      $region35: #{tpu_custom_call.1} parent=5 // pred_region
        %s217 = ssub.s32 %s16, 1
        %s218 = sand.u32 %s85, 1
        %s219 = scalar_lea.sflag [#allocation3], %s218
        %s220 = sand.u32 %s85, 1
        %s221 = smul.addr %s220, 32
        %s222 = scalar_lea.vmem [#allocation2], %s221
        // Predicated region
        $region37: #{tpu_custom_call.1} parent=35 // pred_check
          %p223 = pneg %p98
        $region38: #{tpu_custom_call.1} parent=35 // pred_check_branch
          %225 = sbr.rel (%p223) target = $region40
        $region39: #{tpu_custom_call.1} parent=35 // pred_region
          %227 = dma.done %s219, 512
        $region40: #{tpu_custom_call.1} parent=35 // pred_fallthru
          _
        %p228 = pneg %p49
        %p229 = pneg %p46
        %p230 = pneg %p70
        %p231 = pneg %p67
        %s232 = sand.u32 %s85, 1
        %s233 = scalar_lea.sflag [#allocation3], %s232
        %s234 = sand.u32 %s85, 1
        %s235 = smul.addr %s234, 32
        %s236 = scalar_lea.vmem [#allocation2], %s235
        %p237 = pneg %p98
        %p238 = pneg %p95
        %p239 = scmp.lt.s32.totalorder %s25, 1
        %s240 = scalar_select %p239, %s25, 1
        %p241 = scmp.lt.s32.totalorder %s26, 0
        %s242 = scalar_select %p241, %s26, 0
        %s243 = sadd.s32 %s242, %s240
        %s244 = scalar_lea.vmem %s3, %s243
        %p245 = pneg %p126
        %p246 = pneg %p123
        %p247 = pneg %p154
        %p248 = pneg %p151
        %s249 = sand.u32 %s141, 1
        %s250 = scalar_lea.sflag [#allocation4], %s249
        %s251 = sand.u32 %s141, 1
        %s252 = smul.addr %s251, 32
        %s253 = scalar_lea.vmem [#allocation5], %s252
        %p254 = scmp.lt.s32.totalorder %s25, 1
        %s255 = scalar_select %p254, %s25, 1
        %p256 = scmp.lt.s32.totalorder %s26, 0
        %s257 = scalar_select %p256, %s26, 0
        %s258 = sadd.s32 %s257, %s255
        %s259 = scalar_lea.vmem %s3, %s258
        %v260 = vld [vmem:[%s0] sm:$0xff]
        %v261 = vld [vmem:[%s0 + $0x8] sm:$0xff]
        %v262 = vld [vmem:[%s0 + $0x10] sm:$0xff]
        %v263 = vld [vmem:[%s0 + $0x18] sm:$0xff]
        %v264 = vld [vmem:[%s222] sm:$0xff]
        %v265 = vld [vmem:[%s222 + $0x8] sm:$0xff]
        %v266 = vld [vmem:[%s222 + $0x10] sm:$0xff]
        %v267 = vld [vmem:[%s222 + $0x18] sm:$0xff]
        %v268 = vld [vmem:[%s1] sm:$0xff]
        %v269 = vld [vmem:[%s1 + $0x8] sm:$0xff]
        %v270 = vld [vmem:[%s1 + $0x10] sm:$0xff]
        %v271 = vld [vmem:[%s1 + $0x18] sm:$0xff]
        %273 = vset.pattern.permute.xlu0 0
        %274 = vperm.xlu0 %273, %v268
        %v275 = vpop.permute.xlu0 %274
        %278 = vset.pattern.permute.xlu0 0
        %279 = vperm.xlu0 %278, %v269
        %v280 = vpop.permute.xlu0 %279
        %283 = vset.pattern.permute.xlu0 0
        %284 = vperm.xlu0 %283, %v270
        %v285 = vpop.permute.xlu0 %284
        %288 = vset.pattern.permute.xlu0 0
        %289 = vperm.xlu0 %288, %v271
        %v290 = vpop.permute.xlu0 %289
        %vm292 = vcmask 261120
        %v294 = vsel %vm292, %v260, 0
        %v297 = vsel %vm292, %v261, 0
        %v300 = vsel %vm292, %v262, 0
        %v303 = vsel %vm292, %v263, 0
        %305 = vmatpush.msra.mxu0 0.0
        %306 = vmatpush.msra.mxu0 0.0
        %307 = vmatpush.msra.mxu0 0.0
        %308 = vmatpush.msra.mxu0 0.0
        %309 = vmatpush.msra.mxu0 0.0
        %310 = vmatpush.msra.mxu0 0.0
        %311 = vmatpush.msra.mxu0 0.0
        %312 = vmatpush.msra.mxu0 0.0
        %313 = vmatpush.msra.mxu0 0.0
        %314 = vmatpush.msra.mxu0 0.0
        %315 = vmatpush.msra.mxu0 0.0
        %316 = vmatpush.msra.mxu0 0.0
        %317 = vmatpush.msra.mxu0 %v267
        %318 = vmatpush.msra.mxu0 %v266
        %319 = vmatpush.msra.mxu0 %v265
        %320 = vmatpush.msra.mxu0 %v264
        %321 = vmatmul.f32.gmra.mxu0 %v294
        %v322 = vpop.f32.mrf.mxu0
        %v323 = vadd.f32 %v275, %v322
        %324 = vmatmul.f32.gmra.mxu0 %v297
        %v325 = vpop.f32.mrf.mxu0
        %v326 = vadd.f32 %v280, %v325
        %327 = vmatmul.f32.gmra.mxu0 %v300
        %v328 = vpop.f32.mrf.mxu0
        %v329 = vadd.f32 %v285, %v328
        %330 = vmatmul.f32.gmra.mxu0 %v303
        %v331 = vpop.f32.mrf.mxu0
        %v332 = vadd.f32 %v290, %v331
        %333 = vdwg.mxu0
        %v334 = vld [vmem:[%s259] sm:$0x1]
        %v336 = vperm.slane %v334, 0
        %v338 = vmul.f32 %v323, %v336
        %v339 = vmul.f32 %v326, %v336
        %v340 = vmul.f32 %v329, %v336
        %v341 = vmul.f32 %v332, %v336
        %342 = vst [vmem:[%s253] sm:$0xff] %v338
        %343 = vst [vmem:[%s253 + $0x8] sm:$0xff] %v339
        %344 = vst [vmem:[%s253 + $0x10] sm:$0xff] %v340
        %345 = vst [vmem:[%s253 + $0x18] sm:$0xff] %v341
        %s346 = sand.u32 %s141, 1
        %s347 = scalar_lea.sflag [#allocation4], %s346
        %s348 = sand.u32 %s141, 1
        %s349 = smul.addr %s348, 32
        %s350 = scalar_lea.vmem [#allocation5], %s349
        // Predicated region
        $region41: #{tpu_custom_call.1} parent=35 // pred_check
          %p351 = pneg %p151
        $region42: #{tpu_custom_call.1} parent=35 // pred_check_branch
          %353 = sbr.rel (%p351) target = $region44
        $region43: #{tpu_custom_call.1} parent=35 // pred_region
          %355 = vsyncadd %s347, 0
          %s356 = smul.addr %s25, 4
          %s357 = sadd.s32 %s26, %s356
          %s358 = smul.addr %s357, 8
          %s359 = scalar_lea.hbm %s4, %s358
          %s360 = sshll.u32 %s350, 4
          %s361 = int_to_ptr.vmem [resolvable:$true] %s360
          %s362 = sshll.u32 %s359, 4
          %s363 = int_to_ptr.hbm [resolvable:$true] %s362
          %368 = dma.vmem_to_hbm [thread:$0]  %s361, 512, %s363, %s347, 128, 128, 8
        $region44: #{tpu_custom_call.1} parent=35 // pred_fallthru
          _
      $region36: #{tpu_custom_call.1} parent=5 // pred_fallthru
        _
      %p369 = scmp.le.s32.totalorder 2, %s16
      // Predicated region
      $region45: #{tpu_custom_call.1} parent=5 // pred_check
        %p370 = pneg %p369
      $region46: #{tpu_custom_call.1} parent=5 // pred_check_branch
        %372 = sbr.rel (%p370) target = $region48
      $region47: #{tpu_custom_call.1} parent=5 // pred_region
        %s373 = ssub.s32 %s16, 2
        // Predicated region
        $region49: #{tpu_custom_call.1} parent=47 // pred_check
          %p374 = pneg %p157
        $region50: #{tpu_custom_call.1} parent=47 // pred_check_branch
          %376 = sbr.rel (%p374) target = $region52
        $region51: #{tpu_custom_call.1} parent=47 // pred_region
          %s377 = sand.u32 %s142, 1
          %s378 = scalar_lea.sflag [#allocation4], %s377
          %s379 = sand.u32 %s142, 1
          %s380 = smul.addr %s379, 32
          %s381 = scalar_lea.vmem [#allocation5], %s380
          %383 = dma.done %s378, 512
        $region52: #{tpu_custom_call.1} parent=47 // pred_fallthru
          _
      $region48: #{tpu_custom_call.1} parent=5 // pred_fallthru
        _
    $region6: #{tpu_custom_call.1} parent=1 // loop_footer
      %s20 = sadd.s32 1, %s16
    $region7: #{tpu_custom_call.1} parent=1 // loop_footer_branch
      %15 = sbr.rel target = $region3
    $region8: #{tpu_custom_call.1} parent=1 // loop_exit
      _
    %384 = vsyncpa [#allocation3], 1
    %s385 = scalar_lea.sflag [#allocation3], 1
    %386 = vsyncpa %s385, 1
    %387 = vsyncpa [#allocation4], 1
    %s388 = scalar_lea.sflag [#allocation4], 1
    %389 = vsyncpa %s388, 1

</llo_original>
